<compile_context>
chip_gen: v7x
topology: tpu7x:2x2x1
jax: 0.10.0
libtpu: 0.0.40
codegen_flags: <defaults>
</compile_context>

<pallas_src>
import functools

import jax
import jax.numpy as jnp
from jax.experimental import pallas as pl
from jax.experimental.pallas import tpu as pltpu


def _giou_tile(pred_ref, target_ref, weight_ref, eps):
    """Weighted GIoU loss for one (8, TILE) tile of boxes."""
    px1, py1, px2, py2 = pred_ref[0], pred_ref[1], pred_ref[2], pred_ref[3]
    tx1, ty1, tx2, ty2 = target_ref[0], target_ref[1], target_ref[2], target_ref[3]

    # Intersection.
    iw = jnp.maximum(jnp.minimum(px2, tx2) - jnp.maximum(px1, tx1), 0.0)
    ih = jnp.maximum(jnp.minimum(py2, ty2) - jnp.maximum(py1, ty1), 0.0)
    overlap = iw * ih

    # Areas & union.
    ap = (px2 - px1) * (py2 - py1)
    ag = (tx2 - tx1) * (ty2 - ty1)
    union = ap + ag - overlap + eps

    # Smallest enclosing box.
    ew = jnp.maximum(jnp.maximum(px2, tx2) - jnp.minimum(px1, tx1), 0.0)
    eh = jnp.maximum(jnp.maximum(py2, ty2) - jnp.minimum(py1, ty1), 0.0)
    enclose = ew * eh + eps

    # loss = 1 - giou = 2 - overlap/union - union/enclose
    # Exact divides kept so the rtol=1e-5 check holds; the kernel is HBM-bound
    # (9 input vregs per output vreg of loss), so they are already hidden.
    loss = 2.0 - overlap / union - union / enclose
    return loss * weight_ref[...]


def _giou_sum_kernel(pred_ref, target_ref, weight_ref, sum_ref, acc_ref, *, eps):
    """mean/sum path: VMEM vector accumulator, single XLU reduce at the end."""
    i = pl.program_id(0)

    @pl.when(i == 0)
    def _():
        acc_ref[...] = jnp.zeros_like(acc_ref)

    acc_ref[...] += _giou_tile(pred_ref, target_ref, weight_ref, eps)

    @pl.when(i == pl.num_programs(0) - 1)
    def _():
        sum_ref[0] = jnp.sum(acc_ref[...])


def _giou_none_kernel(pred_ref, target_ref, weight_ref, loss_ref, *, eps):
    """reduction='none' path: lane-dense per-box weighted loss."""
    loss_ref[...] = _giou_tile(pred_ref, target_ref, weight_ref, eps)


def _pack(pred, target, w, lane_tile):
    """Sublane-dense packing: box b -> (b // cols, b % cols)."""
    n = pred.shape[0]
    cols = max(-(-n // 8), 1)                  # ceil(n / 8)
    cols = ((cols + 127) // 128) * 128         # lane dim multiple of 128
    if cols > lane_tile:
        cols = ((cols + lane_tile - 1) // lane_tile) * lane_tile
        tile = lane_tile
    else:
        tile = cols
    npad = cols * 8
    pad = npad - n
    pred_p = jnp.pad(pred, ((0, pad), (0, 0))).T.reshape(4, 8, cols)
    target_p = jnp.pad(target, ((0, pad), (0, 0))).T.reshape(4, 8, cols)
    w_p = jnp.pad(w, (0, pad)).reshape(8, cols)     # zero pad => padded loss = 0
    return pred_p, target_p, w_p, cols, tile


def giou_loss_2d(pred, target, weight=None, avg_factor=None,
                 loss_weight=1.0, eps=1e-6, reduction="mean",
                 lane_tile=512):
    """Mirror of GIoULoss2D.forward (pred/target: (N, 4), weight: (N,))."""
    pred = pred.astype(jnp.float32)
    target = target.astype(jnp.float32)
    n = pred.shape[0]

    # TODO(synk): the data-dependent early return `(pred * weight).sum()` when
    # no weight > 0 is not replicated (degenerate branch in the reference).
    if weight is not None and weight.ndim > 1:
        assert weight.shape == pred.shape
        weight = weight.mean(-1)
    if weight is None:
        w = jnp.ones((n,), jnp.float32)
    else:
        w = weight.astype(jnp.float32)

    pred_p, target_p, w_p, cols, tile = _pack(pred, target, w, lane_tile)
    num_tiles = cols // tile

    in_specs = [
        pl.BlockSpec((4, 8, tile), lambda i: (0, 0, i)),
        pl.BlockSpec((4, 8, tile), lambda i: (0, 0, i)),
        pl.BlockSpec((8, tile), lambda i: (0, i)),
    ]
    args = (pred_p, target_p, w_p)

    if reduction == "none":
        per_loss = pl.pallas_call(
            functools.partial(_giou_none_kernel, eps=eps),
            grid=(num_tiles,),
            in_specs=in_specs,
            out_specs=pl.BlockSpec((8, tile), lambda i: (0, i)),
            out_shape=jax.ShapeDtypeStruct((8, cols), jnp.float32),
            compiler_params=pltpu.CompilerParams(
                dimension_semantics=("parallel",)),
        )(*args)
        loss = per_loss.reshape(-1)[:n]
    elif reduction in ("mean", "sum"):
        total = pl.pallas_call(
            functools.partial(_giou_sum_kernel, eps=eps),
            grid=(num_tiles,),
            in_specs=in_specs,
            # Scalar sum lands in SMEM; output stays resident across the
            # (reduction) grid axis, so the axis is "arbitrary".
            out_specs=pl.BlockSpec(memory_space=pltpu.MemorySpace.SMEM),
            out_shape=jax.ShapeDtypeStruct((1,), jnp.float32),
            scratch_shapes=[pltpu.VMEM((8, tile), jnp.float32)],
            compiler_params=pltpu.CompilerParams(
                dimension_semantics=("arbitrary",)),
        )(*args)[0]
        if reduction == "mean":
            denom = (jnp.float32(n) if avg_factor is None
                     else jnp.asarray(avg_factor, jnp.float32))
            loss = total / denom
        else:  # "sum" -- avg_factor is not applicable here
            loss = total
    else:
        raise ValueError(f"unknown reduction: {reduction}")
    return loss_weight * loss


def _giou_loss_ref(pred, target, eps=1e-6):
    """Pure-JAX per-box reference of GIoULoss2D._cal_giou_loss."""
    lt = jnp.maximum(pred[:, :2], target[:, :2])
    rb = jnp.minimum(pred[:, 2:], target[:, 2:])
    wh = jnp.maximum(rb - lt, 0.0)
    overlap = wh[:, 0] * wh[:, 1]
    ap = (pred[:, 2] - pred[:, 0]) * (pred[:, 3] - pred[:, 1])
    ag = (target[:, 2] - target[:, 0]) * (target[:, 3] - target[:, 1])
    union = ap + ag - overlap + eps
    ious = overlap / union
    e_lt = jnp.minimum(pred[:, :2], target[:, :2])
    e_rb = jnp.maximum(pred[:, 2:], target[:, 2:])
    e_wh = jnp.maximum(e_rb - e_lt, 0.0)
    e_area = e_wh[:, 0] * e_wh[:, 1] + eps
    gious = ious - (e_area - union) / e_area
    return 1.0 - gious


def _make_boxes(key, n):
    k1, k2, k3, k4, k5 = jax.random.split(key, 5)
    p_xy = jax.random.uniform(k1, (n, 2), jnp.float32, 0.0, 8.0)
    p_wh = jax.random.uniform(k2, (n, 2), jnp.float32, 0.5, 6.0)
    pred = jnp.concatenate([p_xy, p_xy + p_wh], axis=-1)
    t_xy = jax.random.uniform(k3, (n, 2), jnp.float32, 0.0, 8.0)
    t_wh = jax.random.uniform(k4, (n, 2), jnp.float32, 0.5, 6.0)
    target = jnp.concatenate([t_xy, t_xy + t_wh], axis=-1)
    weight = jax.random.uniform(k5, (n, ), jnp.float32, 0.1, 1.0)
    return pred, target, weight


if __name__ == "__main__":
    # GIoULoss2D has no learnable parameters; deterministic config only.
    loss_weight, eps = 1.0, 1e-6
    key = jax.random.PRNGKey(0)
    k_a, k_b = jax.random.split(key, 2)

    # --- small case: N = 8 boxes, single tile ---
    pred, target, weight = _make_boxes(k_a, 8)
    ref_per = _giou_loss_ref(pred, target, eps) * weight

    out_mean = giou_loss_2d(pred, target, weight=weight, reduction="mean",
                            loss_weight=loss_weight, eps=eps)
    out_mean = jax.block_until_ready(out_mean)
    assert jnp.allclose(out_mean, ref_per.mean() * loss_weight,
                        rtol=1e-5, atol=1e-6), (out_mean, ref_per.mean())

    out_sum = giou_loss_2d(pred, target, weight=weight, reduction="sum",
                           loss_weight=loss_weight, eps=eps)
    out_sum = jax.block_until_ready(out_sum)
    assert jnp.allclose(out_sum, ref_per.sum() * loss_weight,
                        rtol=1e-5, atol=1e-6), (out_sum, ref_per.sum())

    out_none = giou_loss_2d(pred, target, weight=weight, reduction="none",
                            loss_weight=loss_weight, eps=eps)
    out_none = jax.block_until_ready(out_none)
    assert jnp.allclose(out_none, ref_per * loss_weight,
                        rtol=1e-5, atol=1e-6)

    # --- multi-tile case: exercises the cross-tile VMEM accumulator ---
    pred2, target2, weight2 = _make_boxes(k_b, 2500)
    ref2 = (_giou_loss_ref(pred2, target2, eps) * weight2).mean()
    out2 = giou_loss_2d(pred2, target2, weight=weight2, reduction="mean",
                        loss_weight=loss_weight, eps=eps, lane_tile=128)
    out2 = jax.block_until_ready(out2)
    assert jnp.allclose(out2, ref2 * loss_weight, rtol=1e-5, atol=1e-6), (out2, ref2)

    # --- avg_factor + 2-D weight paths ---
    w2d = jnp.broadcast_to(weight2[:, None], pred2.shape)
    out3 = giou_loss_2d(pred2, target2, weight=w2d, avg_factor=1234.5,
                        reduction="mean", loss_weight=2.0, eps=eps)
    out3 = jax.block_until_ready(out3)
    ref3 = (_giou_loss_ref(pred2, target2, eps) * weight2).sum() / 1234.5 * 2.0
    assert jnp.allclose(out3, ref3, rtol=1e-5, atol=1e-6), (out3, ref3)

    print("KERNEL_OK")
</pallas_src>

<mosaic_0001>
module attributes {stable_mosaic.version = 11 : i64} {
  func.func @_giou_sum_kernel(%arg0: i32, %arg1: memref<4x8x128xf32, #tpu.memory_space<vmem>>, %arg2: memref<4x8x128xf32, #tpu.memory_space<vmem>>, %arg3: memref<8x128xf32, #tpu.memory_space<vmem>>, %arg4: memref<1xf32, #tpu.memory_space<smem>>, %arg5: memref<8x128xf32, #tpu.memory_space<vmem>>) attributes {dimension_semantics = [#tpu.dimension_semantics<arbitrary>], iteration_bounds = array<i64: 1>, scalar_prefetch = 0 : i64, scratch_operands = 1 : i64, tpu.core_type = #tpu.core_type<tc>, window_params = [{transform_indices = @transform_0, window_bounds = array<i64: 4, 8, 128>}, {transform_indices = @transform_1, window_bounds = array<i64: 4, 8, 128>}, {transform_indices = @transform_2, window_bounds = array<i64: 8, 128>}, {transform_indices = @transform_3, window_bounds = array<i64: 1>}]} {
    %c0_i32 = arith.constant 0 : i32
    %0 = arith.cmpi eq, %arg0, %c0_i32 : i32
    %1 = arith.extui %0 : i1 to i32
    %c0_i32_0 = arith.constant 0 : i32
    %2 = arith.cmpi ne, %1, %c0_i32_0 : i32
    scf.if %2 {
      %cst_35 = arith.constant 0.000000e+00 : f32
      %66 = vector.broadcast %cst_35 : f32 to vector<8x128xf32>
      %c0_36 = arith.constant 0 : index
      %c0_37 = arith.constant 0 : index
      %67 = vector.load %arg5[%c0_36, %c0_37] : memref<8x128xf32, #tpu.memory_space<vmem>>, vector<8x128xf32>
      tpu.vector_store %arg5[%c0_36, %c0_37], %66 {strides = array<i32>} : memref<8x128xf32, #tpu.memory_space<vmem>>, vector<8x128xf32>,
    } else {
    }
    %c0 = arith.constant 0 : index
    %c0_1 = arith.constant 0 : index
    %3 = vector.load %arg5[%c0, %c0_1] : memref<8x128xf32, #tpu.memory_space<vmem>>, vector<8x128xf32>
    %c0_2 = arith.constant 0 : index
    %c0_3 = arith.constant 0 : index
    %c0_4 = arith.constant 0 : index
    %4 = vector.load %arg1[%c0_2, %c0_3, %c0_4] : memref<4x8x128xf32, #tpu.memory_space<vmem>>, vector<1x8x128xf32>
    %5 = vector.shape_cast %4 : vector<1x8x128xf32> to vector<8x128xf32>
    %c1 = arith.constant 1 : index
    %c0_5 = arith.constant 0 : index
    %c0_6 = arith.constant 0 : index
    %6 = vector.load %arg1[%c1, %c0_5, %c0_6] : memref<4x8x128xf32, #tpu.memory_space<vmem>>, vector<1x8x128xf32>
    %7 = vector.shape_cast %6 : vector<1x8x128xf32> to vector<8x128xf32>
    %c2 = arith.constant 2 : index
    %c0_7 = arith.constant 0 : index
    %c0_8 = arith.constant 0 : index
    %8 = vector.load %arg1[%c2, %c0_7, %c0_8] : memref<4x8x128xf32, #tpu.memory_space<vmem>>, vector<1x8x128xf32>
    %9 = vector.shape_cast %8 : vector<1x8x128xf32> to vector<8x128xf32>
    %c3 = arith.constant 3 : index
    %c0_9 = arith.constant 0 : index
    %c0_10 = arith.constant 0 : index
    %10 = vector.load %arg1[%c3, %c0_9, %c0_10] : memref<4x8x128xf32, #tpu.memory_space<vmem>>, vector<1x8x128xf32>
    %11 = vector.shape_cast %10 : vector<1x8x128xf32> to vector<8x128xf32>
    %c0_11 = arith.constant 0 : index
    %c0_12 = arith.constant 0 : index
    %c0_13 = arith.constant 0 : index
    %12 = vector.load %arg2[%c0_11, %c0_12, %c0_13] : memref<4x8x128xf32, #tpu.memory_space<vmem>>, vector<1x8x128xf32>
    %13 = vector.shape_cast %12 : vector<1x8x128xf32> to vector<8x128xf32>
    %c1_14 = arith.constant 1 : index
    %c0_15 = arith.constant 0 : index
    %c0_16 = arith.constant 0 : index
    %14 = vector.load %arg2[%c1_14, %c0_15, %c0_16] : memref<4x8x128xf32, #tpu.memory_space<vmem>>, vector<1x8x128xf32>
    %15 = vector.shape_cast %14 : vector<1x8x128xf32> to vector<8x128xf32>
    %c2_17 = arith.constant 2 : index
    %c0_18 = arith.constant 0 : index
    %c0_19 = arith.constant 0 : index
    %16 = vector.load %arg2[%c2_17, %c0_18, %c0_19] : memref<4x8x128xf32, #tpu.memory_space<vmem>>, vector<1x8x128xf32>
    %17 = vector.shape_cast %16 : vector<1x8x128xf32> to vector<8x128xf32>
    %c3_20 = arith.constant 3 : index
    %c0_21 = arith.constant 0 : index
    %c0_22 = arith.constant 0 : index
    %18 = vector.load %arg2[%c3_20, %c0_21, %c0_22] : memref<4x8x128xf32, #tpu.memory_space<vmem>>, vector<1x8x128xf32>
    %19 = vector.shape_cast %18 : vector<1x8x128xf32> to vector<8x128xf32>
    %20 = arith.minimumf %9, %17 : vector<8x128xf32>
    %21 = arith.maximumf %5, %13 : vector<8x128xf32>
    %22 = arith.subf %20, %21 : vector<8x128xf32>
    %cst = arith.constant 0.000000e+00 : f32
    %23 = vector.broadcast %cst : f32 to vector<8x128xf32>
    %24 = arith.maximumf %22, %23 : vector<8x128xf32>
    %25 = arith.minimumf %11, %19 : vector<8x128xf32>
    %26 = arith.maximumf %7, %15 : vector<8x128xf32>
    %27 = arith.subf %25, %26 : vector<8x128xf32>
    %cst_23 = arith.constant 0.000000e+00 : f32
    %28 = vector.broadcast %cst_23 : f32 to vector<8x128xf32>
    %29 = arith.maximumf %27, %28 : vector<8x128xf32>
    %30 = arith.mulf %24, %29 : vector<8x128xf32>
    %31 = arith.subf %9, %5 : vector<8x128xf32>
    %32 = arith.subf %11, %7 : vector<8x128xf32>
    %33 = arith.mulf %31, %32 : vector<8x128xf32>
    %34 = arith.subf %17, %13 : vector<8x128xf32>
    %35 = arith.subf %19, %15 : vector<8x128xf32>
    %36 = arith.mulf %34, %35 : vector<8x128xf32>
    %37 = arith.addf %33, %36 : vector<8x128xf32>
    %38 = arith.subf %37, %30 : vector<8x128xf32>
    %cst_24 = arith.constant 9.99999997E-7 : f32
    %39 = vector.broadcast %cst_24 : f32 to vector<8x128xf32>
    %40 = arith.addf %38, %39 : vector<8x128xf32>
    %41 = arith.maximumf %9, %17 : vector<8x128xf32>
    %42 = arith.minimumf %5, %13 : vector<8x128xf32>
    %43 = arith.subf %41, %42 : vector<8x128xf32>
    %cst_25 = arith.constant 0.000000e+00 : f32
    %44 = vector.broadcast %cst_25 : f32 to vector<8x128xf32>
    %45 = arith.maximumf %43, %44 : vector<8x128xf32>
    %46 = arith.maximumf %11, %19 : vector<8x128xf32>
    %47 = arith.minimumf %7, %15 : vector<8x128xf32>
    %48 = arith.subf %46, %47 : vector<8x128xf32>
    %cst_26 = arith.constant 0.000000e+00 : f32
    %49 = vector.broadcast %cst_26 : f32 to vector<8x128xf32>
    %50 = arith.maximumf %48, %49 : vector<8x128xf32>
    %51 = arith.mulf %45, %50 : vector<8x128xf32>
    %cst_27 = arith.constant 9.99999997E-7 : f32
    %52 = vector.broadcast %cst_27 : f32 to vector<8x128xf32>
    %53 = arith.addf %51, %52 : vector<8x128xf32>
    %54 = arith.divf %30, %40 : vector<8x128xf32>
    %cst_28 = arith.constant 2.000000e+00 : f32
    %55 = vector.broadcast %cst_28 : f32 to vector<8x128xf32>
    %56 = arith.subf %55, %54 : vector<8x128xf32>
    %57 = arith.divf %40, %53 : vector<8x128xf32>
    %58 = arith.subf %56, %57 : vector<8x128xf32>
    %c0_29 = arith.constant 0 : index
    %c0_30 = arith.constant 0 : index
    %59 = vector.load %arg3[%c0_29, %c0_30] : memref<8x128xf32, #tpu.memory_space<vmem>>, vector<8x128xf32>
    %60 = arith.mulf %58, %59 : vector<8x128xf32>
    %61 = arith.addf %3, %60 : vector<8x128xf32>
    %c0_31 = arith.constant 0 : index
    %c0_32 = arith.constant 0 : index
    %62 = vector.load %arg5[%c0_31, %c0_32] : memref<8x128xf32, #tpu.memory_space<vmem>>, vector<8x128xf32>
    tpu.vector_store %arg5[%c0_31, %c0_32], %61 {strides = array<i32>} : memref<8x128xf32, #tpu.memory_space<vmem>>, vector<8x128xf32>,
    %c0_i32_33 = arith.constant 0 : i32
    %63 = arith.cmpi eq, %arg0, %c0_i32_33 : i32
    %64 = arith.extui %63 : i1 to i32
    %c0_i32_34 = arith.constant 0 : i32
    %65 = arith.cmpi ne, %64, %c0_i32_34 : i32
    scf.if %65 {
      %c0_35 = arith.constant 0 : index
      %c0_36 = arith.constant 0 : index
      %66 = vector.load %arg5[%c0_35, %c0_36] : memref<8x128xf32, #tpu.memory_space<vmem>>, vector<8x128xf32>
      %67 = vector.shape_cast %66 : vector<8x128xf32> to vector<1x8x128xf32>
      %cst_37 = arith.constant dense<0.000000e+00> : vector<1xf32>
      %68 = vector.multi_reduction <add>, %67, %cst_37 [1, 2] : vector<1x8x128xf32> to vector<1xf32>
      %69 = vector.shape_cast %68 : vector<1xf32> to vector<1x1x1xf32>
      %70 = vector.extract %69[0, 0, 0] : f32 from vector<1x1x1xf32>
      %c0_38 = arith.constant 0 : index
      %71 = memref.load %arg4[%c0_38] : memref<1xf32, #tpu.memory_space<smem>>
      memref.store %70, %arg4[%c0_38] : memref<1xf32, #tpu.memory_space<smem>>
    } else {
    }
    return
  }
  func.func @transform_0(%arg0: i32) -> (i32, i32, i32) {
    %c0_i32 = arith.constant 0 : i32
    %c0_i32_0 = arith.constant 0 : i32
    %c0_i32_1 = arith.constant 0 : i32
    return %c0_i32, %c0_i32_0, %arg0 : i32, i32, i32
  }
  func.func @transform_1(%arg0: i32) -> (i32, i32, i32) {
    %c0_i32 = arith.constant 0 : i32
    %c0_i32_0 = arith.constant 0 : i32
    %c0_i32_1 = arith.constant 0 : i32
    return %c0_i32, %c0_i32_0, %arg0 : i32, i32, i32
  }
  func.func @transform_2(%arg0: i32) -> (i32, i32) {
    %c0_i32 = arith.constant 0 : i32
    %c0_i32_0 = arith.constant 0 : i32
    return %c0_i32, %arg0 : i32, i32
  }
  func.func @transform_3(%arg0: i32) -> i32 {
    %c0_i32 = arith.constant 0 : i32
    %c0_i32_0 = arith.constant 0 : i32
    return %c0_i32 : i32
  }
}

</mosaic_0001>

<llo_original>
// kernel: tpu_custom_call.1
$region0: #{tpu_custom_call.1}
  #allocation0 [shape = 'u32[]', space=smem, size = 0x4, offset = 0x4, fixed_abs, tag = 'smem constant byte address 0x4 - core index']
  #allocation1 [shape = 'u32[144,128]{1,0:T(1,128)}', space=vmem, size = 0x12000, scoped, tag = 'internal scratch']
  #allocation2 [shape = 'f32[8,128]{1,0:T(8,128)}', space=vmem, size = 0x1000, scoped, tag = 'scratch operand']
  %s0 = inlined_call_operand.hbm [shape: f32[4,8,128], index: 0, kind: input, shape index: {}]
  %s1 = inlined_call_operand.hbm [shape: f32[4,8,128], index: 1, kind: input, shape index: {}]
  %s2 = inlined_call_operand.hbm [shape: f32[8,128], index: 2, kind: input, shape index: {}]
  %s3 = inlined_call_operand.hbm [shape: f32[1], index: 3, kind: output, shape index: {}]
  %s4 = sld [smem:[#allocation0]]
  $region42: #{tpu_custom_call.1} parent=0
    _
  %s6 = ssub.s32 1, %s4
  %s7 = scalar_select 0, %s6, %s4
  $region1: #{tpu_custom_call.1} parent=0
    #allocation3 [shape = 'u8[16384]{0}', space=vmem, size = 0x4000, scoped, tag = 'input window, operand 0, single buffered']
    #allocation4 [shape = 's32[1]{0}', space=sflag, size = 0x4, scoped, tag = 'scoped memory for tpu_custom_call.1']
    #allocation5 [shape = 's32[1]{0}', space=sflag, size = 0x4, scoped, tag = 'scoped memory for tpu_custom_call.1']
    #allocation6 [shape = 'u8[16384]{0}', space=vmem, size = 0x4000, scoped, tag = 'input window, operand 1, single buffered']
    #allocation7 [shape = 's32[1]{0}', space=sflag, size = 0x4, scoped, tag = 'scoped memory for tpu_custom_call.1']
    #allocation8 [shape = 'u8[4096]{0}', space=vmem, size = 0x1000, scoped, tag = 'input window, operand 2, single buffered']
    #allocation9 [shape = 'u8[512]{0}', space=smem, size = 0x200, scoped, tag = 'output window, operand 0, single buffered']
    %8 = vsyncpa [#allocation4], 0
    %9 = vsyncpa [#allocation7], 0
    %10 = vsyncpa [#allocation5], 0
    // Predicated region
    $region2: #{tpu_custom_call.1} parent=1 // pred_check
      _
    $region3: #{tpu_custom_call.1} parent=1 // pred_check_branch
      %12 = sbr.rel (0) target = $region5
    $region4: #{tpu_custom_call.1} parent=1 // pred_region
      %s14 = ssub.s32 512, 512
      %15 = vsyncadd [#allocation4], %s14
      %s16 = sshll.u32 [#allocation3], 4
      %s17 = int_to_ptr.vmem [resolvable:$true] %s16
      %22 = dma.hbm_to_vmem [thread:$0]  %s0, 512, %s17, [#allocation4], 128, 128, 8
    $region5: #{tpu_custom_call.1} parent=1 // pred_fallthru
      _
    // Predicated region
    $region6: #{tpu_custom_call.1} parent=1 // pred_check
      _
    $region7: #{tpu_custom_call.1} parent=1 // pred_check_branch
      %24 = sbr.rel (0) target = $region9
    $region8: #{tpu_custom_call.1} parent=1 // pred_region
      %s26 = ssub.s32 512, 512
      %27 = vsyncadd [#allocation7], %s26
      %s28 = sshll.u32 [#allocation6], 4
      %s29 = int_to_ptr.vmem [resolvable:$true] %s28
      %34 = dma.hbm_to_vmem [thread:$0]  %s1, 512, %s29, [#allocation7], 128, 128, 8
    $region9: #{tpu_custom_call.1} parent=1 // pred_fallthru
      _
    // Predicated region
    $region10: #{tpu_custom_call.1} parent=1 // pred_check
      _
    $region11: #{tpu_custom_call.1} parent=1 // pred_check_branch
      %36 = sbr.rel (0) target = $region13
    $region12: #{tpu_custom_call.1} parent=1 // pred_region
      %s38 = ssub.s32 128, 128
      %39 = vsyncadd [#allocation7], %s38
      %s41 = sshll.u32 [#allocation8], 4
      %s42 = int_to_ptr.vmem [resolvable:$true] %s41
      %44 = dma.hbm_to_vmem [thread:$0]  %s2, 128, %s42, [#allocation7]
    $region13: #{tpu_custom_call.1} parent=1 // pred_fallthru
      _
    // Predicated region
    $region14: #{tpu_custom_call.1} parent=1 // pred_check
      _
    $region15: #{tpu_custom_call.1} parent=1 // pred_check_branch
      %46 = sbr.rel (0) target = $region17
    $region16: #{tpu_custom_call.1} parent=1 // pred_region
      %47 = dma.done [#allocation4], 512
    $region17: #{tpu_custom_call.1} parent=1 // pred_fallthru
      _
    // Predicated region
    $region18: #{tpu_custom_call.1} parent=1 // pred_check
      _
    $region19: #{tpu_custom_call.1} parent=1 // pred_check_branch
      %49 = sbr.rel (0) target = $region21
    $region20: #{tpu_custom_call.1} parent=1 // pred_region
      %50 = dma.done [#allocation7], 512
    $region21: #{tpu_custom_call.1} parent=1 // pred_fallthru
      _
    // Predicated region
    $region22: #{tpu_custom_call.1} parent=1 // pred_check
      _
    $region23: #{tpu_custom_call.1} parent=1 // pred_check_branch
      %52 = sbr.rel (0) target = $region25
    $region24: #{tpu_custom_call.1} parent=1 // pred_region
      %53 = dma.done [#allocation7], 128
    $region25: #{tpu_custom_call.1} parent=1 // pred_fallthru
      _
    %p54 = scmp.eq.s32.totalorder 0, 0
    // Predicated region
    $region26: #{tpu_custom_call.1} parent=1 // pred_check
      %p55 = pneg %p54
    $region27: #{tpu_custom_call.1} parent=1 // pred_check_branch
      %57 = sbr.rel (%p55) target = $region29
    $region28: #{tpu_custom_call.1} parent=1 // pred_region
      %58 = vst [vmem:[#allocation2] sm:$0xff] 0.0
    $region29: #{tpu_custom_call.1} parent=1 // pred_fallthru
      _
    %v59 = vld [vmem:[#allocation2] sm:$0xff]
    %v60 = vld [vmem:[#allocation3] sm:$0xff]
    %s61 = scalar_lea.vmem [#allocation3], 8
    %v62 = vld [vmem:[%s61] sm:$0xff]
    %s63 = scalar_lea.vmem [#allocation3], 16
    %v64 = vld [vmem:[%s63] sm:$0xff]
    %s65 = scalar_lea.vmem [#allocation3], 24
    %v66 = vld [vmem:[%s65] sm:$0xff]
    %v67 = vld [vmem:[#allocation6] sm:$0xff]
    %s68 = scalar_lea.vmem [#allocation6], 8
    %v69 = vld [vmem:[%s68] sm:$0xff]
    %s70 = scalar_lea.vmem [#allocation6], 16
    %v71 = vld [vmem:[%s70] sm:$0xff]
    %s72 = scalar_lea.vmem [#allocation6], 24
    %v73 = vld [vmem:[%s72] sm:$0xff]
    %v74 = vmin.f32 %v64, %v71
    %v75 = vmax.f32 %v60, %v67
    %v76 = vsub.f32 %v74, %v75
    %v77 = vmax.f32 %v76, 0.0
    %v78 = vmin.f32 %v66, %v73
    %v79 = vmax.f32 %v62, %v69
    %v80 = vsub.f32 %v78, %v79
    %v81 = vmax.f32 %v80, 0.0
    %v82 = vmul.f32 %v77, %v81
    %v83 = vsub.f32 %v64, %v60
    %v84 = vsub.f32 %v66, %v62
    %v85 = vmul.f32 %v83, %v84
    %v86 = vsub.f32 %v71, %v67
    %v87 = vsub.f32 %v73, %v69
    %v88 = vmul.f32 %v86, %v87
    %v89 = vadd.f32 %v85, %v88
    %v90 = vsub.f32 %v89, %v82
    %v91 = vadd.f32 %v90, 1e-06
    %v92 = vmax.f32 %v64, %v71
    %v93 = vmin.f32 %v60, %v67
    %v94 = vsub.f32 %v92, %v93
    %v95 = vmax.f32 %v94, 0.0
    %v96 = vmax.f32 %v66, %v73
    %v97 = vmin.f32 %v62, %v69
    %v98 = vsub.f32 %v96, %v97
    %v99 = vmax.f32 %v98, 0.0
    %v100 = vmul.f32 %v95, %v99
    %v101 = vadd.f32 %v100, 1e-06
    %v102 = vrcp.pop %v91
    %v103 = vmul.f32 %v82, %v102
    %v104 = vsub.f32 2.0, %v103
    %v105 = vrcp.pop %v101
    %v106 = vmul.f32 %v91, %v105
    %v107 = vsub.f32 %v104, %v106
    %v108 = vld [vmem:[#allocation8] sm:$0xff]
    %v109 = vmul.f32 %v107, %v108
    %v110 = vadd.f32 %v59, %v109
    %111 = vst [vmem:[#allocation2] sm:$0xff] %v110
    // Predicated region
    $region30: #{tpu_custom_call.1} parent=1 // pred_check
      %p112 = pneg %p54
    $region31: #{tpu_custom_call.1} parent=1 // pred_check_branch
      %114 = sbr.rel (%p112) target = $region33
    $region32: #{tpu_custom_call.1} parent=1 // pred_region
      %v115 = vld [vmem:[#allocation2] sm:$0xff]
      %116 = vadd.xlane.f32.xlu0 %v115
      %v117 = vpop.xlane.xlu0 %116
      %v118 = vrot.slane %v117, 4
      %v119 = vadd.f32 %v117, %v118
      %v120 = vrot.slane %v119, 2
      %v121 = vadd.f32 %v119, %v120
      %v122 = vrot.slane %v121, 1
      %v123 = vadd.f32 %v121, %v122
      %s124 = vtos %v123
      %s125 = scalar_lea.smem [#allocation9], 0
      %126 = sst [smem:[%s125]] %s124
    $region33: #{tpu_custom_call.1} parent=1 // pred_fallthru
      _
    // Predicated region
    $region34: #{tpu_custom_call.1} parent=1 // pred_check
      _
    $region35: #{tpu_custom_call.1} parent=1 // pred_check_branch
      %128 = sbr.rel (0) target = $region37
    $region36: #{tpu_custom_call.1} parent=1 // pred_region
      %s130 = ssub.s32 16, 16
      %131 = vsyncadd [#allocation5], %s130
      %134 = dma.smem_to_hbm [#allocation9], 16, %s3, [#allocation5]
    $region37: #{tpu_custom_call.1} parent=1 // pred_fallthru
      _
    // Predicated region
    $region38: #{tpu_custom_call.1} parent=1 // pred_check
      _
    $region39: #{tpu_custom_call.1} parent=1 // pred_check_branch
      %136 = sbr.rel (0) target = $region41
    $region40: #{tpu_custom_call.1} parent=1 // pred_region
      %137 = dma.done [#allocation5], 16
    $region41: #{tpu_custom_call.1} parent=1 // pred_fallthru
      _
    %138 = sfence
    %139 = vsyncpa [#allocation4], 1
    %140 = vsyncpa [#allocation7], 1
    %141 = vsyncpa [#allocation5], 1

</llo_original>
